<compile_context>
chip_gen: v7x
topology: tpu7x:2x2x1
jax: 0.10.0
libtpu: 0.0.40
codegen_flags: <defaults>
</compile_context>

<pallas_src>
import functools

import jax
import jax.numpy as jnp
from jax.experimental import pallas as pl
from jax.experimental.pallas import tpu as pltpu


def _round_up(x, m):
    return ((x + m - 1) // m) * m


def _pad2d(a, rows, cols):
    pr, pc = rows - a.shape[0], cols - a.shape[1]
    if pr or pc:
        a = jnp.pad(a, ((0, pr), (0, pc)))
    return a


# ----------------------------------------------------------------------------
# Kernels
# ----------------------------------------------------------------------------
def _squash_fullk_kernel(gb_ref, x_ref, w_ref, o_ref):
    """One (tm, tn) output tile, full-K matmul, fused gate/bias epilogue."""
    acc = jnp.dot(x_ref[...], w_ref[...], preferred_element_type=jnp.float32)
    gate = gb_ref[0:1, :]      # sigmoid(t*wh + bh), precomputed in wrapper
    bgate = gb_ref[1:2, :]     # b * gate
    o_ref[...] = (acc * gate + bgate).astype(o_ref.dtype)


def _squash_ktiled_kernel(gb_ref, x_ref, w_ref, o_ref, acc_ref):
    """Fallback for very large dim_in: (M, N, K) tiling, K innermost."""
    k = pl.program_id(2)

    @pl.when(k == 0)
    def _():
        acc_ref[...] = jnp.zeros_like(acc_ref)

    acc_ref[...] += jnp.dot(x_ref[...], w_ref[...],
                            preferred_element_type=jnp.float32)

    @pl.when(k == pl.num_programs(2) - 1)
    def _():
        o_ref[...] = (acc_ref[...] * gb_ref[0:1, :] + gb_ref[1:2, :]
                      ).astype(o_ref.dtype)


# ----------------------------------------------------------------------------
# Wrapper
# ----------------------------------------------------------------------------
@functools.partial(jax.jit, static_argnames=("tm", "tn", "tk", "compute_dtype"))
def squash_linear(t, x, w, b, wh, bh, *, tm=512, tn=512, tk=2048,
                  compute_dtype=jnp.bfloat16):
    """SquashLinear forward.

    t:  scalar "time"
    x:  (B, dim_in)
    w:  (dim_in, dim_out)   layer weight, already transposed vs. torch layout
    b:  (1, dim_out)        layer bias
    wh: (1, dim_out)        hyper weight (torch (dim_out, 1) transposed)
    bh: (1, dim_out)        hyper bias
    returns (B, dim_out)
    """
    B, din = x.shape
    dout = w.shape[1]
    out_dtype = x.dtype

    # --- gate precompute: tiny (1, dout) op, done once in XLA ---------------
    t_scalar = jnp.asarray(t, dtype=jnp.float32).reshape(())
    gate = jax.nn.sigmoid(t_scalar * wh.astype(jnp.float32)
                          + bh.astype(jnp.float32))            # (1, dout)
    bgate = b.astype(jnp.float32) * gate                        # (1, dout)
    gb = jnp.concatenate([gate, bgate], axis=0)                 # (2, dout)

    # --- tile sizing ---------------------------------------------------------
    tm = min(tm, _round_up(B, 16))       # sublane-aligned for bf16 packing
    tn = min(tn, _round_up(dout, 128))   # lane-dense output tiles
    Bp = _round_up(B, tm)
    doutp = _round_up(dout, tn)

    # v7x megacore: if batch only yields one M block, split N so both
    # TensorCores get a block (free on single-TC v5e/v6e).
    if Bp // tm == 1 and doutp == tn and tn % 256 == 0:
        tn //= 2

    full_k = din <= 4096
    if full_k:
        dinp = _round_up(din, 128)
        tk = dinp
    else:
        tk = min(tk, _round_up(din, 128))
        dinp = _round_up(din, tk)

    # --- pad only when needed (K padding is the only correctness-critical one);
    #     cast matmul operands to bf16 ----------------------------------------
    x_c = _pad2d(x, Bp, dinp).astype(compute_dtype)
    w_c = _pad2d(w, dinp, doutp).astype(compute_dtype)
    gb_p = _pad2d(gb, 2, doutp)          # stays f32

    if full_k:
        grid = (Bp // tm, doutp // tn)
        out = pl.pallas_call(
            _squash_fullk_kernel,
            out_shape=jax.ShapeDtypeStruct((Bp, doutp), out_dtype),
            grid_spec=pltpu.PrefetchScalarGridSpec(
                num_scalar_prefetch=0,
                grid=grid,
                in_specs=[
                    pl.BlockSpec((2, tn), lambda i, j: (0, j)),      # gate / b*gate
                    pl.BlockSpec((tm, dinp), lambda i, j: (i, 0)),   # x (loaded once per i)
                    pl.BlockSpec((dinp, tn), lambda i, j: (0, j)),   # w (streams per j)
                ],
                out_specs=pl.BlockSpec((tm, tn), lambda i, j: (i, j)),
            ),
            compiler_params=pltpu.CompilerParams(
                dimension_semantics=("parallel", "parallel"),
                vmem_limit_bytes=40 * 1024 * 1024,
            ),
        )(gb_p, x_c, w_c)
    else:
        grid = (Bp // tm, doutp // tn, dinp // tk)
        out = pl.pallas_call(
            _squash_ktiled_kernel,
            out_shape=jax.ShapeDtypeStruct((Bp, doutp), out_dtype),
            grid_spec=pltpu.PrefetchScalarGridSpec(
                num_scalar_prefetch=0,
                grid=grid,
                in_specs=[
                    pl.BlockSpec((2, tn), lambda i, j, k: (0, j)),
                    pl.BlockSpec((tm, tk), lambda i, j, k: (i, k)),
                    pl.BlockSpec((tk, tn), lambda i, j, k: (k, j)),
                ],
                out_specs=pl.BlockSpec((tm, tn), lambda i, j, k: (i, j)),
                scratch_shapes=[pltpu.VMEM((tm, tn), jnp.float32)],
            ),
            compiler_params=pltpu.CompilerParams(
                dimension_semantics=("parallel", "parallel", "arbitrary"),
                vmem_limit_bytes=40 * 1024 * 1024,
            ),
        )(gb_p, x_c, w_c)

    if Bp != B or doutp != dout:
        out = out[:B, :dout]
    return out


if __name__ == "__main__":
    key = jax.random.PRNGKey(0)
    B, DIN, DOUT = 8, 32, 32  # small shapes consistent with SquashLinear(dim_in, dim_out)

    kx, kw, kb, kwh, kbh = jax.random.split(key, 5)
    x = jax.random.normal(kx, (B, DIN), dtype=jnp.float32)

    # Mimic nn.Linear's uniform(-1/sqrt(fan_in), 1/sqrt(fan_in)) init.
    bound_l = 1.0 / (DIN ** 0.5)
    w = jax.random.uniform(kw, (DIN, DOUT), jnp.float32, -bound_l, bound_l)
    b = jax.random.uniform(kb, (1, DOUT), jnp.float32, -bound_l, bound_l)
    wh = jax.random.uniform(kwh, (1, DOUT), jnp.float32, -1.0, 1.0)  # hyper fan_in = 1
    bh = jax.random.uniform(kbh, (1, DOUT), jnp.float32, -1.0, 1.0)

    t = 0.3  # scalar time input (torch: t.view(-1, 1) -> (1, 1) -> gate broadcasts)

    out = squash_linear(t, x, w, b, wh, bh)
    out = jax.block_until_ready(out)
    assert out.shape == (B, DOUT)

    gate = jax.nn.sigmoid(t * wh + bh)

    # Tight check against a reference using the same bf16 operand rounding.
    ref_bf16 = (jnp.dot(x.astype(jnp.bfloat16), w.astype(jnp.bfloat16),
                        preferred_element_type=jnp.float32) + b) * gate
    assert jnp.allclose(out, ref_bf16, atol=1e-5, rtol=1e-5)

    # Loose check against the full-f32 PyTorch-equivalent reference.
    ref_f32 = (x @ w + b) * gate
    assert jnp.allclose(out, ref_f32, atol=3e-2, rtol=3e-2)

    print("KERNEL_OK")
</pallas_src>

<mosaic_0001>
module attributes {stable_mosaic.version = 11 : i64} {
  func.func @_squash_fullk_kernel(%arg0: i32, %arg1: i32, %arg2: memref<2x128xf32, #tpu.memory_space<vmem>>, %arg3: memref<16x128xbf16, #tpu.memory_space<vmem>>, %arg4: memref<128x128xbf16, #tpu.memory_space<vmem>>, %arg5: memref<16x128xf32, #tpu.memory_space<vmem>>) attributes {dimension_semantics = [#tpu.dimension_semantics<parallel>, #tpu.dimension_semantics<parallel>], iteration_bounds = array<i64: 1, 1>, scalar_prefetch = 0 : i64, scratch_operands = 0 : i64, tpu.core_type = #tpu.core_type<tc>, window_params = [{transform_indices = @transform_0, window_bounds = array<i64: 2, 128>}, {transform_indices = @transform_1, window_bounds = array<i64: 16, 128>}, {transform_indices = @transform_2, window_bounds = array<i64: 128, 128>}, {transform_indices = @transform_3, window_bounds = array<i64: 16, 128>}]} {
    %c0 = arith.constant 0 : index
    %c0_0 = arith.constant 0 : index
    %0 = vector.load %arg3[%c0, %c0_0] : memref<16x128xbf16, #tpu.memory_space<vmem>>, vector<16x128xbf16>
    %c0_1 = arith.constant 0 : index
    %c0_2 = arith.constant 0 : index
    %1 = vector.load %arg4[%c0_1, %c0_2] : memref<128x128xbf16, #tpu.memory_space<vmem>>, vector<128x128xbf16>
    %cst = arith.constant dense<0.000000e+00> : vector<16x128xf32>
    %2 = tpu.matmul %0, %1, %cst {dimension_numbers = #tpu.dot_dimension_numbers<[1], [0], [0], [1], [0, 0, 1, 1], [], []>} : vector<16x128xbf16>, vector<128x128xbf16>, vector<16x128xf32> -> vector<16x128xf32>
    %c0_3 = arith.constant 0 : index
    %c0_4 = arith.constant 0 : index
    %3 = vector.load %arg2[%c0_3, %c0_4] : memref<2x128xf32, #tpu.memory_space<vmem>>, vector<1x128xf32>
    %c1 = arith.constant 1 : index
    %c0_5 = arith.constant 0 : index
    %4 = vector.load %arg2[%c1, %c0_5] : memref<2x128xf32, #tpu.memory_space<vmem>>, vector<1x128xf32>
    %5 = vector.broadcast %3 : vector<1x128xf32> to vector<16x128xf32>
    %6 = arith.mulf %2, %5 : vector<16x128xf32>
    %7 = vector.broadcast %4 : vector<1x128xf32> to vector<16x128xf32>
    %8 = arith.addf %6, %7 : vector<16x128xf32>
    %c0_6 = arith.constant 0 : index
    %c0_7 = arith.constant 0 : index
    %9 = vector.load %arg5[%c0_6, %c0_7] : memref<16x128xf32, #tpu.memory_space<vmem>>, vector<16x128xf32>
    tpu.vector_store %arg5[%c0_6, %c0_7], %8 {strides = array<i32>} : memref<16x128xf32, #tpu.memory_space<vmem>>, vector<16x128xf32>,
    return
  }
  func.func @transform_0(%arg0: i32, %arg1: i32) -> (i32, i32) {
    %c0_i32 = arith.constant 0 : i32
    %c0_i32_0 = arith.constant 0 : i32
    return %c0_i32, %arg1 : i32, i32
  }
  func.func @transform_1(%arg0: i32, %arg1: i32) -> (i32, i32) {
    %c0_i32 = arith.constant 0 : i32
    %c0_i32_0 = arith.constant 0 : i32
    return %arg0, %c0_i32 : i32, i32
  }
  func.func @transform_2(%arg0: i32, %arg1: i32) -> (i32, i32) {
    %c0_i32 = arith.constant 0 : i32
    %c0_i32_0 = arith.constant 0 : i32
    return %c0_i32, %arg1 : i32, i32
  }
  func.func @transform_3(%arg0: i32, %arg1: i32) -> (i32, i32) {
    %c0_i32 = arith.constant 0 : i32
    return %arg0, %arg1 : i32, i32
  }
}

</mosaic_0001>

<llo_original>
// kernel: squash_linear.1
$region0: #{squash_linear.1}
  #allocation0 [shape = 'u32[]', space=smem, size = 0x4, offset = 0x4, fixed_abs, tag = 'smem constant byte address 0x4 - core index']
  #allocation1 [shape = 'u32[144,128]{1,0:T(1,128)}', space=vmem, size = 0x12000, scoped, tag = 'internal scratch']
  %s0 = inlined_call_operand.vmem [shape: f32[2,128], index: 0, kind: input, shape index: {}]
  %s1 = inlined_call_operand.vmem [shape: bf16[16,128], index: 1, kind: input, shape index: {}]
  %s2 = inlined_call_operand.vmem [shape: bf16[128,128], index: 2, kind: input, shape index: {}]
  %s3 = inlined_call_operand.vmem [shape: f32[16,128], index: 3, kind: output, shape index: {}]
  %s4 = sld [smem:[#allocation0]]
  $region22: #{squash_linear.1} parent=0
    _
  %s6 = ssub.s32 1, %s4
  %s7 = scalar_select 0, %s6, %s4
  // Predicated region
  $region2: #{squash_linear.1} parent=0 // pred_check
    _
  $region3: #{squash_linear.1} parent=0 // pred_check_branch
    %9 = sbr.rel (0) target = $region5
  $region4: #{squash_linear.1} parent=0 // pred_region
    _
  $region5: #{squash_linear.1} parent=0 // pred_fallthru
    _
  // Predicated region
  $region6: #{squash_linear.1} parent=0 // pred_check
    _
  $region7: #{squash_linear.1} parent=0 // pred_check_branch
    %11 = sbr.rel (0) target = $region9
  $region8: #{squash_linear.1} parent=0 // pred_region
    _
  $region9: #{squash_linear.1} parent=0 // pred_fallthru
    _
  // Predicated region
  $region10: #{squash_linear.1} parent=0 // pred_check
    _
  $region11: #{squash_linear.1} parent=0 // pred_check_branch
    %13 = sbr.rel (0) target = $region13
  $region12: #{squash_linear.1} parent=0 // pred_region
    _
  $region13: #{squash_linear.1} parent=0 // pred_fallthru
    _
  %v15 = vld [vmem:[%s1] sm:$0xf]
  %v16 = vld [vmem:[%s1 + $0x4] sm:$0xf]
  %v17 = vld [vmem:[%s2] sm:$0xf]
  %v18 = vld [vmem:[%s2 + $0x4] sm:$0xf]
  %v19 = vld [vmem:[%s2 + $0x8] sm:$0xf]
  %v20 = vld [vmem:[%s2 + $0xc] sm:$0xf]
  %v21 = vld [vmem:[%s2 + $0x10] sm:$0xf]
  %v22 = vld [vmem:[%s2 + $0x14] sm:$0xf]
  %v23 = vld [vmem:[%s2 + $0x18] sm:$0xf]
  %v24 = vld [vmem:[%s2 + $0x1c] sm:$0xf]
  %v25 = vld [vmem:[%s2 + $0x20] sm:$0xf]
  %v26 = vld [vmem:[%s2 + $0x24] sm:$0xf]
  %v27 = vld [vmem:[%s2 + $0x28] sm:$0xf]
  %v28 = vld [vmem:[%s2 + $0x2c] sm:$0xf]
  %v29 = vld [vmem:[%s2 + $0x30] sm:$0xf]
  %v30 = vld [vmem:[%s2 + $0x34] sm:$0xf]
  %v31 = vld [vmem:[%s2 + $0x38] sm:$0xf]
  %v32 = vld [vmem:[%s2 + $0x3c] sm:$0xf]
  %v35 = vunpack.c.l.b16 %v15
  %v36 = vunpack.c.l.b16 %v16
  %v37 = vpack.c.b16 %v36, %v35
  %v55 = vunpack.c.l.b16 %v17
  %v56 = vunpack.c.l.b16 %v18
  %v57 = vunpack.c.l.b16 %v19
  %v58 = vunpack.c.l.b16 %v20
  %v59 = vunpack.c.l.b16 %v21
  %v60 = vunpack.c.l.b16 %v22
  %v61 = vunpack.c.l.b16 %v23
  %v62 = vunpack.c.l.b16 %v24
  %v63 = vunpack.c.l.b16 %v25
  %v64 = vunpack.c.l.b16 %v26
  %v65 = vunpack.c.l.b16 %v27
  %v66 = vunpack.c.l.b16 %v28
  %v67 = vunpack.c.l.b16 %v29
  %v68 = vunpack.c.l.b16 %v30
  %v69 = vunpack.c.l.b16 %v31
  %v70 = vunpack.c.l.b16 %v32
  %v71 = vpack.c.b16 %v56, %v55
  %v72 = vpack.c.b16 %v58, %v57
  %v73 = vpack.c.b16 %v60, %v59
  %v74 = vpack.c.b16 %v62, %v61
  %v75 = vpack.c.b16 %v64, %v63
  %v76 = vpack.c.b16 %v66, %v65
  %v77 = vpack.c.b16 %v68, %v67
  %v78 = vpack.c.b16 %v70, %v69
  %87 = vmatprep.subr.bf16.mxu0 0
  %88 = vmatpush1.bf16.msra.mxu0 %v71
  %89 = vmatprep.subr.bf16.mxu0 0
  %90 = vmatpush1.bf16.msra.mxu0 %v72
  %91 = vmatprep.subr.bf16.mxu0 0
  %92 = vmatpush1.bf16.msra.mxu0 %v73
  %93 = vmatprep.subr.bf16.mxu0 0
  %94 = vmatpush1.bf16.msra.mxu0 %v74
  %95 = vmatprep.subr.bf16.mxu0 0
  %96 = vmatpush1.bf16.msra.mxu0 %v75
  %97 = vmatprep.subr.bf16.mxu0 0
  %98 = vmatpush1.bf16.msra.mxu0 %v76
  %99 = vmatprep.subr.bf16.mxu0 0
  %100 = vmatpush1.bf16.msra.mxu0 %v77
  %101 = vmatprep.subr.bf16.mxu0 0
  %102 = vmatpush1.bf16.msra.mxu0 %v78
  %103 = vmatprep.subr.bf16.mxu0 0
  %104 = vmatpush1.bf16.msra.mxu0 0
  %105 = vmatprep.subr.bf16.mxu0 0
  %106 = vmatpush1.bf16.msra.mxu0 0
  %107 = vmatprep.subr.bf16.mxu0 0
  %108 = vmatpush1.bf16.msra.mxu0 0
  %109 = vmatprep.subr.bf16.mxu0 0
  %110 = vmatpush1.bf16.msra.mxu0 0
  %111 = vmatprep.subr.bf16.mxu0 0
  %112 = vmatpush1.bf16.msra.mxu0 0
  %113 = vmatprep.subr.bf16.mxu0 0
  %114 = vmatpush1.bf16.msra.mxu0 0
  %115 = vmatprep.subr.bf16.mxu0 0
  %116 = vmatpush1.bf16.msra.mxu0 0
  %117 = vmatprep.subr.bf16.mxu0 0
  %118 = vmatpush1.bf16.msra.mxu0 0
  %119 = vmatprep.mubr.bf16.mxu0 0
  %120 = vmatmul.mubr.bf16.gmra.mrb[0].mxu0 %v37
  %v121 = vpop.f32.mrb[0].mxu0
  %v122 = vadd.f32 0.0, %v121
  %v123 = vpop.f32.mrb[0].mxu0
  %v124 = vpop.f32.mrb[0].mxu0
  %v125 = vadd.f32 0.0, %v124
  %v126 = vpop.f32.mrb[0].mxu0
  %127 = vdwg.mxu0
  %v128 = vld [vmem:[%s0] sm:$0x1]
  %v129 = vld [vmem:[%s0 + $0x1] sm:$0x1]
  %v130 = vlaneseq
  %v131 = vshrl.u32 %v130, 7
  %v132 = vsub.s32 0, %v131
  %v133 = vrot.slane %v128, %v132
  %v134 = vmul.f32 %v122, %v133
  %v135 = vmul.f32 %v125, %v133
  %v136 = vlaneseq
  %v137 = vshrl.u32 %v136, 7
  %v138 = vsub.s32 0, %v137
  %v139 = vrot.slane %v129, %v138
  %v140 = vadd.f32 %v134, %v139
  %v141 = vadd.f32 %v135, %v139
  %142 = vst [vmem:[%s3] sm:$0xff] %v140
  %143 = vst [vmem:[%s3 + $0x8] sm:$0xff] %v141
  // Predicated region
  $region14: #{squash_linear.1} parent=0 // pred_check
    _
  $region15: #{squash_linear.1} parent=0 // pred_check_branch
    %145 = sbr.rel (0) target = $region17
  $region16: #{squash_linear.1} parent=0 // pred_region
    _
  $region17: #{squash_linear.1} parent=0 // pred_fallthru
    _
  // Predicated region
  $region18: #{squash_linear.1} parent=0 // pred_check
    _
  $region19: #{squash_linear.1} parent=0 // pred_check_branch
    %147 = sbr.rel (0) target = $region21
  $region20: #{squash_linear.1} parent=0 // pred_region
    _
  $region21: #{squash_linear.1} parent=0 // pred_fallthru
    _

</llo_original>
